<compile_context>
chip_gen: v7x
topology: tpu7x:2x2x1
jax: 0.10.0
libtpu: 0.0.40
codegen_flags: <defaults>
</compile_context>

<pallas_src>
import functools

import jax
import jax.numpy as jnp
from jax.experimental import pallas as pl
from jax.experimental.pallas import tpu as pltpu

BOARD_SIZE = 11
BOARD_AREA = BOARD_SIZE * BOARD_SIZE   # 121
L_1NUM = 242
L_2NUM = 242
L_3NUM = 182
L_4NUM = 121

# Logical (unpadded) and padded layer widths: [in, l1, l2, l3, l4, out]
_DIMS = [L_1NUM, L_1NUM, L_2NUM, L_3NUM, L_4NUM, BOARD_AREA]
_PAD_DIMS = [256, 256, 256, 256, 128, 128]

_TB_MAX = 1024   # max batch tile (multiple of 8); VMEM footprint stays ~6 MiB


def _round_up(x, m):
    return ((x + m - 1) // m) * m


def _device_kind():
    try:
        return jax.devices()[0].device_kind.lower()
    except Exception:
        return ""


_KIND = _device_kind()
# v5e has no bf16 VALU -> keep the bias-add/ReLU epilogue in f32 there.
_IS_V5E = ("v5e" in _KIND) or ("v5 lite" in _KIND) or ("v5litepod" in _KIND)
# v7x has 2 TensorCores per chip -> make sure the batch grid has >= 2 steps.
_IS_V7 = "v7" in _KIND

_EPILOGUE_DTYPE = jnp.float32 if _IS_V5E else jnp.bfloat16


# ---------------------------------------------------------------------------
# One-time parameter preparation (hoisted out of the per-call forward).
# ---------------------------------------------------------------------------
def prepare_params(params, epilogue_dtype=_EPILOGUE_DTYPE):
    """Pad + cast weights/biases once.

    params: list of (W_t [fan_in, fan_out] f32, b [1, fan_out] f32).
    Returns list of (w_pad bf16 [pin, pout], b_pad [1, pout]); hidden-layer
    biases are stored in `epilogue_dtype`, the final-layer bias stays f32.
    """
    assert len(params) == 5
    padded = []
    for li, (w, b) in enumerate(params):
        fin, fout = w.shape
        assert (fin, fout) == (_DIMS[li], _DIMS[li + 1]), (fin, fout, li)
        pin, pout = _PAD_DIMS[li], _PAD_DIMS[li + 1]
        w_pad = jnp.zeros((pin, pout), jnp.bfloat16)
        w_pad = w_pad.at[:fin, :fout].set(w.astype(jnp.bfloat16))
        b_dtype = jnp.float32 if li == len(params) - 1 else epilogue_dtype
        b_pad = jnp.zeros((1, pout), b_dtype)
        b_pad = b_pad.at[:, :fout].set(b.reshape(1, fout).astype(b_dtype))
        padded.append((w_pad, b_pad))
    return padded


# ---------------------------------------------------------------------------
# Kernel: whole forward pass for one batch tile; weights stay VMEM-resident.
# ---------------------------------------------------------------------------
def _mlp_kernel(x_ref,
                w1_ref, b1_ref,
                w2_ref, b2_ref,
                w3_ref, b3_ref,
                w4_ref, b4_ref,
                w5_ref, b5_ref,
                out_ref):

    def hidden(h, w_ref, b_ref):
        # bf16 x bf16 -> f32 accumulation on the MXU.
        acc = jnp.dot(h, w_ref[...], preferred_element_type=jnp.float32)
        # Epilogue dtype follows the bias dtype (bf16 on v6e/v7x, f32 on v5e).
        acc = acc.astype(b_ref.dtype) + b_ref[...]
        return jnp.maximum(acc, 0).astype(jnp.bfloat16)

    h = x_ref[...]                       # [TB, 256] bf16
    h = hidden(h, w1_ref, b1_ref)        # [TB, 256]
    h = hidden(h, w2_ref, b2_ref)        # [TB, 256]
    h = hidden(h, w3_ref, b3_ref)        # [TB, 256]
    h = hidden(h, w4_ref, b4_ref)        # [TB, 128]
    acc = jnp.dot(h, w5_ref[...], preferred_element_type=jnp.float32)
    out_ref[...] = acc + b5_ref[...]     # [TB, 128] f32 (lane-dense store)


# ---------------------------------------------------------------------------
# Tiling choice.
# ---------------------------------------------------------------------------
def _choose_tiling(B):
    # On v7x, force >= 2 grid steps so the "parallel" batch axis shards across
    # both TensorCores (for any non-trivial batch); elsewhere keep one big
    # tile to avoid per-grid-step overhead (~0.35 us/step).
    min_steps = 2 if (_IS_V7 and B >= 16) else 1
    n_steps = max(-(-B // _TB_MAX), min_steps)
    tb = _round_up(-(-B // n_steps), 8)
    b_pad = tb * n_steps
    return tb, b_pad, n_steps


# ---------------------------------------------------------------------------
# Forward wrapper.
# ---------------------------------------------------------------------------
def gomoku_net_forward(x, padded_params):
    """x: [B, 242] float32 (or bf16). padded_params: output of prepare_params."""
    B, f_in = x.shape
    assert f_in == L_1NUM
    D = _PAD_DIMS

    TB, B_pad, n_steps = _choose_tiling(B)

    # Single cheap pad+cast pass on the activations (weights are pre-padded).
    x_pad = jnp.pad(x.astype(jnp.bfloat16), ((0, B_pad - B), (0, D[0] - f_in)))

    flat_args = [x_pad]
    in_specs = [pl.BlockSpec((TB, D[0]), lambda i: (i, 0))]
    for w_pad, b_pad in padded_params:
        pin, pout = w_pad.shape
        flat_args.append(w_pad)
        flat_args.append(b_pad)
        # Weights/biases: full-array blocks, always block (0, 0) -> VMEM-resident.
        in_specs.append(pl.BlockSpec((pin, pout), lambda i: (0, 0)))
        in_specs.append(pl.BlockSpec((1, pout), lambda i: (0, 0)))

    out_spec = pl.BlockSpec((TB, D[-1]), lambda i: (i, 0))

    flops = 2 * B_pad * sum(D[i] * D[i + 1] for i in range(5))
    bytes_accessed = (sum(int(a.size) * a.dtype.itemsize for a in flat_args)
                      + B_pad * D[-1] * 4)

    out_pad = pl.pallas_call(
        _mlp_kernel,
        out_shape=jax.ShapeDtypeStruct((B_pad, D[-1]), jnp.float32),
        grid=(n_steps,),
        in_specs=in_specs,
        out_specs=out_spec,
        compiler_params=pltpu.CompilerParams(
            dimension_semantics=("parallel",)),
        cost_estimate=pl.CostEstimate(
            flops=flops, transcendentals=0, bytes_accessed=bytes_accessed),
    )(*flat_args)

    return out_pad[:B, :BOARD_AREA]


# ---------------------------------------------------------------------------
# Init + reference.
# ---------------------------------------------------------------------------
def init_params(key):
    """PyTorch Linear-compatible shapes (W: [out, in], b: [out]) stored
    transposed as W_t: [in, out], b: [1, out] for the kernel."""
    dims = [(L_1NUM, L_1NUM),
            (L_1NUM, L_2NUM),
            (L_2NUM, L_3NUM),
            (L_3NUM, L_4NUM),
            (L_4NUM, BOARD_AREA)]
    params = []
    for (fan_in, fan_out) in dims:
        key, kw, kb = jax.random.split(key, 3)
        bound = 1.0 / jnp.sqrt(jnp.float32(fan_in))
        w_t = jax.random.uniform(kw, (fan_in, fan_out), jnp.float32,
                                 minval=-bound, maxval=bound)
        b = jax.random.uniform(kb, (1, fan_out), jnp.float32,
                               minval=-bound, maxval=bound)
        params.append((w_t, b))
    return params


def reference_forward(x, params, epilogue_dtype=_EPILOGUE_DTYPE):
    """Pure-JAX reference matching the kernel's bf16-weight / f32-accum and
    epilogue-dtype numerics."""
    h = x.astype(jnp.bfloat16)
    n = len(params)
    for i, (w, b) in enumerate(params):
        acc = jnp.dot(h, w.astype(jnp.bfloat16),
                      preferred_element_type=jnp.float32)
        if i < n - 1:
            acc = acc.astype(epilogue_dtype) + b.astype(epilogue_dtype)
            h = jnp.maximum(acc, 0).astype(jnp.bfloat16)
        else:
            h = acc + b.astype(jnp.float32)
    return h


if __name__ == "__main__":
    key = jax.random.PRNGKey(0)
    key, kx = jax.random.split(key)
    B = 8
    x = jax.random.normal(kx, (B, L_1NUM), jnp.float32)

    params = init_params(key)
    padded_params = prepare_params(params)          # done ONCE, not per-call

    out = gomoku_net_forward(x, padded_params)
    out = jax.block_until_ready(out)

    ref = reference_forward(x, params)
    assert out.shape == (B, BOARD_AREA)
    assert jnp.allclose(out, ref, atol=2e-2, rtol=2e-2)

    print("KERNEL_OK")
</pallas_src>

<mosaic_0001>
module attributes {stable_mosaic.version = 11 : i64} {
  func.func @_mlp_kernel(%arg0: i32, %arg1: memref<8x256xbf16, #tpu.memory_space<vmem>>, %arg2: memref<256x256xbf16, #tpu.memory_space<vmem>>, %arg3: memref<1x256xbf16, #tpu.memory_space<vmem>>, %arg4: memref<256x256xbf16, #tpu.memory_space<vmem>>, %arg5: memref<1x256xbf16, #tpu.memory_space<vmem>>, %arg6: memref<256x256xbf16, #tpu.memory_space<vmem>>, %arg7: memref<1x256xbf16, #tpu.memory_space<vmem>>, %arg8: memref<256x128xbf16, #tpu.memory_space<vmem>>, %arg9: memref<1x128xbf16, #tpu.memory_space<vmem>>, %arg10: memref<128x128xbf16, #tpu.memory_space<vmem>>, %arg11: memref<1x128xf32, #tpu.memory_space<vmem>>, %arg12: memref<8x128xf32, #tpu.memory_space<vmem>>) attributes {dimension_semantics = [#tpu.dimension_semantics<parallel>], iteration_bounds = array<i64: 1>, scalar_prefetch = 0 : i64, scratch_operands = 0 : i64, tpu.core_type = #tpu.core_type<tc>, window_params = [{transform_indices = @transform_0, window_bounds = array<i64: 8, 256>}, {pipeline_mode = #tpu.pipeline_mode<synchronous>, transform_indices = @transform_1, window_bounds = array<i64: 256, 256>}, {pipeline_mode = #tpu.pipeline_mode<synchronous>, transform_indices = @transform_2, window_bounds = array<i64: 1, 256>}, {pipeline_mode = #tpu.pipeline_mode<synchronous>, transform_indices = @transform_3, window_bounds = array<i64: 256, 256>}, {pipeline_mode = #tpu.pipeline_mode<synchronous>, transform_indices = @transform_4, window_bounds = array<i64: 1, 256>}, {pipeline_mode = #tpu.pipeline_mode<synchronous>, transform_indices = @transform_5, window_bounds = array<i64: 256, 256>}, {pipeline_mode = #tpu.pipeline_mode<synchronous>, transform_indices = @transform_6, window_bounds = array<i64: 1, 256>}, {pipeline_mode = #tpu.pipeline_mode<synchronous>, transform_indices = @transform_7, window_bounds = array<i64: 256, 128>}, {pipeline_mode = #tpu.pipeline_mode<synchronous>, transform_indices = @transform_8, window_bounds = array<i64: 1, 128>}, {pipeline_mode = #tpu.pipeline_mode<synchronous>, transform_indices = @transform_9, window_bounds = array<i64: 128, 128>}, {pipeline_mode = #tpu.pipeline_mode<synchronous>, transform_indices = @transform_10, window_bounds = array<i64: 1, 128>}, {transform_indices = @transform_11, window_bounds = array<i64: 8, 128>}]} {
    %c0 = arith.constant 0 : index
    %c0_0 = arith.constant 0 : index
    %0 = vector.load %arg1[%c0, %c0_0] : memref<8x256xbf16, #tpu.memory_space<vmem>>, vector<8x256xbf16>
    %c0_1 = arith.constant 0 : index
    %c0_2 = arith.constant 0 : index
    %1 = vector.load %arg2[%c0_1, %c0_2] : memref<256x256xbf16, #tpu.memory_space<vmem>>, vector<256x256xbf16>
    %cst = arith.constant dense<0.000000e+00> : vector<8x256xf32>
    %2 = tpu.matmul %0, %1, %cst {dimension_numbers = #tpu.dot_dimension_numbers<[1], [0], [0], [1], [0, 0, 1, 1], [], []>} : vector<8x256xbf16>, vector<256x256xbf16>, vector<8x256xf32> -> vector<8x256xf32>
    %3 = arith.truncf %2 : vector<8x256xf32> to vector<8x256xbf16>
    %c0_3 = arith.constant 0 : index
    %c0_4 = arith.constant 0 : index
    %4 = vector.load %arg3[%c0_3, %c0_4] : memref<1x256xbf16, #tpu.memory_space<vmem>>, vector<1x256xbf16>
    %5 = vector.broadcast %4 : vector<1x256xbf16> to vector<8x256xbf16>
    %6 = arith.addf %3, %5 : vector<8x256xbf16>
    %cst_5 = arith.constant 0.000000e+00 : bf16
    %7 = vector.broadcast %cst_5 : bf16 to vector<8x256xbf16>
    %8 = arith.maximumf %6, %7 : vector<8x256xbf16>
    %c0_6 = arith.constant 0 : index
    %c0_7 = arith.constant 0 : index
    %9 = vector.load %arg4[%c0_6, %c0_7] : memref<256x256xbf16, #tpu.memory_space<vmem>>, vector<256x256xbf16>
    %cst_8 = arith.constant dense<0.000000e+00> : vector<8x256xf32>
    %10 = tpu.matmul %8, %9, %cst_8 {dimension_numbers = #tpu.dot_dimension_numbers<[1], [0], [0], [1], [0, 0, 1, 1], [], []>} : vector<8x256xbf16>, vector<256x256xbf16>, vector<8x256xf32> -> vector<8x256xf32>
    %11 = arith.truncf %10 : vector<8x256xf32> to vector<8x256xbf16>
    %c0_9 = arith.constant 0 : index
    %c0_10 = arith.constant 0 : index
    %12 = vector.load %arg5[%c0_9, %c0_10] : memref<1x256xbf16, #tpu.memory_space<vmem>>, vector<1x256xbf16>
    %13 = vector.broadcast %12 : vector<1x256xbf16> to vector<8x256xbf16>
    %14 = arith.addf %11, %13 : vector<8x256xbf16>
    %cst_11 = arith.constant 0.000000e+00 : bf16
    %15 = vector.broadcast %cst_11 : bf16 to vector<8x256xbf16>
    %16 = arith.maximumf %14, %15 : vector<8x256xbf16>
    %c0_12 = arith.constant 0 : index
    %c0_13 = arith.constant 0 : index
    %17 = vector.load %arg6[%c0_12, %c0_13] : memref<256x256xbf16, #tpu.memory_space<vmem>>, vector<256x256xbf16>
    %cst_14 = arith.constant dense<0.000000e+00> : vector<8x256xf32>
    %18 = tpu.matmul %16, %17, %cst_14 {dimension_numbers = #tpu.dot_dimension_numbers<[1], [0], [0], [1], [0, 0, 1, 1], [], []>} : vector<8x256xbf16>, vector<256x256xbf16>, vector<8x256xf32> -> vector<8x256xf32>
    %19 = arith.truncf %18 : vector<8x256xf32> to vector<8x256xbf16>
    %c0_15 = arith.constant 0 : index
    %c0_16 = arith.constant 0 : index
    %20 = vector.load %arg7[%c0_15, %c0_16] : memref<1x256xbf16, #tpu.memory_space<vmem>>, vector<1x256xbf16>
    %21 = vector.broadcast %20 : vector<1x256xbf16> to vector<8x256xbf16>
    %22 = arith.addf %19, %21 : vector<8x256xbf16>
    %cst_17 = arith.constant 0.000000e+00 : bf16
    %23 = vector.broadcast %cst_17 : bf16 to vector<8x256xbf16>
    %24 = arith.maximumf %22, %23 : vector<8x256xbf16>
    %c0_18 = arith.constant 0 : index
    %c0_19 = arith.constant 0 : index
    %25 = vector.load %arg8[%c0_18, %c0_19] : memref<256x128xbf16, #tpu.memory_space<vmem>>, vector<256x128xbf16>
    %cst_20 = arith.constant dense<0.000000e+00> : vector<8x128xf32>
    %26 = tpu.matmul %24, %25, %cst_20 {dimension_numbers = #tpu.dot_dimension_numbers<[1], [0], [0], [1], [0, 0, 1, 1], [], []>} : vector<8x256xbf16>, vector<256x128xbf16>, vector<8x128xf32> -> vector<8x128xf32>
    %27 = arith.truncf %26 : vector<8x128xf32> to vector<8x128xbf16>
    %c0_21 = arith.constant 0 : index
    %c0_22 = arith.constant 0 : index
    %28 = vector.load %arg9[%c0_21, %c0_22] : memref<1x128xbf16, #tpu.memory_space<vmem>>, vector<1x128xbf16>
    %29 = vector.broadcast %28 : vector<1x128xbf16> to vector<8x128xbf16>
    %30 = arith.addf %27, %29 : vector<8x128xbf16>
    %cst_23 = arith.constant 0.000000e+00 : bf16
    %31 = vector.broadcast %cst_23 : bf16 to vector<8x128xbf16>
    %32 = arith.maximumf %30, %31 : vector<8x128xbf16>
    %c0_24 = arith.constant 0 : index
    %c0_25 = arith.constant 0 : index
    %33 = vector.load %arg10[%c0_24, %c0_25] : memref<128x128xbf16, #tpu.memory_space<vmem>>, vector<128x128xbf16>
    %cst_26 = arith.constant dense<0.000000e+00> : vector<8x128xf32>
    %34 = tpu.matmul %32, %33, %cst_26 {dimension_numbers = #tpu.dot_dimension_numbers<[1], [0], [0], [1], [0, 0, 1, 1], [], []>} : vector<8x128xbf16>, vector<128x128xbf16>, vector<8x128xf32> -> vector<8x128xf32>
    %c0_27 = arith.constant 0 : index
    %c0_28 = arith.constant 0 : index
    %35 = vector.load %arg11[%c0_27, %c0_28] : memref<1x128xf32, #tpu.memory_space<vmem>>, vector<1x128xf32>
    %36 = vector.broadcast %35 : vector<1x128xf32> to vector<8x128xf32>
    %37 = arith.addf %34, %36 : vector<8x128xf32>
    %c0_29 = arith.constant 0 : index
    %c0_30 = arith.constant 0 : index
    %38 = vector.load %arg12[%c0_29, %c0_30] : memref<8x128xf32, #tpu.memory_space<vmem>>, vector<8x128xf32>
    tpu.vector_store %arg12[%c0_29, %c0_30], %37 {strides = array<i32>} : memref<8x128xf32, #tpu.memory_space<vmem>>, vector<8x128xf32>,
    return
  }
  func.func @transform_0(%arg0: i32) -> (i32, i32) {
    %c0_i32 = arith.constant 0 : i32
    %c0_i32_0 = arith.constant 0 : i32
    return %arg0, %c0_i32 : i32, i32
  }
  func.func @transform_1(%arg0: i32) -> (i32, i32) {
    %c0_i32 = arith.constant 0 : i32
    %c0_i32_0 = arith.constant 0 : i32
    %c0_i32_1 = arith.constant 0 : i32
    return %c0_i32, %c0_i32_0 : i32, i32
  }
  func.func @transform_2(%arg0: i32) -> (i32, i32) {
    %c0_i32 = arith.constant 0 : i32
    %c0_i32_0 = arith.constant 0 : i32
    %c0_i32_1 = arith.constant 0 : i32
    return %c0_i32, %c0_i32_0 : i32, i32
  }
  func.func @transform_3(%arg0: i32) -> (i32, i32) {
    %c0_i32 = arith.constant 0 : i32
    %c0_i32_0 = arith.constant 0 : i32
    %c0_i32_1 = arith.constant 0 : i32
    return %c0_i32, %c0_i32_0 : i32, i32
  }
  func.func @transform_4(%arg0: i32) -> (i32, i32) {
    %c0_i32 = arith.constant 0 : i32
    %c0_i32_0 = arith.constant 0 : i32
    %c0_i32_1 = arith.constant 0 : i32
    return %c0_i32, %c0_i32_0 : i32, i32
  }
  func.func @transform_5(%arg0: i32) -> (i32, i32) {
    %c0_i32 = arith.constant 0 : i32
    %c0_i32_0 = arith.constant 0 : i32
    %c0_i32_1 = arith.constant 0 : i32
    return %c0_i32, %c0_i32_0 : i32, i32
  }
  func.func @transform_6(%arg0: i32) -> (i32, i32) {
    %c0_i32 = arith.constant 0 : i32
    %c0_i32_0 = arith.constant 0 : i32
    %c0_i32_1 = arith.constant 0 : i32
    return %c0_i32, %c0_i32_0 : i32, i32
  }
  func.func @transform_7(%arg0: i32) -> (i32, i32) {
    %c0_i32 = arith.constant 0 : i32
    %c0_i32_0 = arith.constant 0 : i32
    %c0_i32_1 = arith.constant 0 : i32
    return %c0_i32, %c0_i32_0 : i32, i32
  }
  func.func @transform_8(%arg0: i32) -> (i32, i32) {
    %c0_i32 = arith.constant 0 : i32
    %c0_i32_0 = arith.constant 0 : i32
    %c0_i32_1 = arith.constant 0 : i32
    return %c0_i32, %c0_i32_0 : i32, i32
  }
  func.func @transform_9(%arg0: i32) -> (i32, i32) {
    %c0_i32 = arith.constant 0 : i32
    %c0_i32_0 = arith.constant 0 : i32
    %c0_i32_1 = arith.constant 0 : i32
    return %c0_i32, %c0_i32_0 : i32, i32
  }
  func.func @transform_10(%arg0: i32) -> (i32, i32) {
    %c0_i32 = arith.constant 0 : i32
    %c0_i32_0 = arith.constant 0 : i32
    %c0_i32_1 = arith.constant 0 : i32
    return %c0_i32, %c0_i32_0 : i32, i32
  }
  func.func @transform_11(%arg0: i32) -> (i32, i32) {
    %c0_i32 = arith.constant 0 : i32
    %c0_i32_0 = arith.constant 0 : i32
    return %arg0, %c0_i32 : i32, i32
  }
}

</mosaic_0001>

<llo_original>
// kernel: tpu_custom_call.1
$region0: #{tpu_custom_call.1}
  #allocation0 [shape = 'u32[]', space=smem, size = 0x4, offset = 0x4, fixed_abs, tag = 'smem constant byte address 0x4 - core index']
  #allocation1 [shape = 'u32[144,128]{1,0:T(1,128)}', space=vmem, size = 0x12000, scoped, tag = 'internal scratch']
  %s0 = inlined_call_operand.hbm [shape: bf16[8,256], index: 0, kind: input, shape index: {}]
  %s1 = inlined_call_operand.hbm [shape: bf16[256,256], index: 1, kind: input, shape index: {}]
  %s2 = inlined_call_operand.vmem [shape: bf16[1,256], index: 2, kind: input, shape index: {}]
  %s3 = inlined_call_operand.hbm [shape: bf16[256,256], index: 3, kind: input, shape index: {}]
  %s4 = inlined_call_operand.vmem [shape: bf16[1,256], index: 4, kind: input, shape index: {}]
  %s5 = inlined_call_operand.hbm [shape: bf16[256,256], index: 5, kind: input, shape index: {}]
  %s6 = inlined_call_operand.vmem [shape: bf16[1,256], index: 6, kind: input, shape index: {}]
  %s7 = inlined_call_operand.hbm [shape: bf16[256,128], index: 7, kind: input, shape index: {}]
  %s8 = inlined_call_operand.vmem [shape: bf16[1,128], index: 8, kind: input, shape index: {}]
  %s9 = inlined_call_operand.hbm [shape: bf16[128,128], index: 9, kind: input, shape index: {}]
  %s10 = inlined_call_operand.vmem [shape: f32[1,128], index: 10, kind: input, shape index: {}]
  %s11 = inlined_call_operand.hbm [shape: f32[8,128], index: 11, kind: output, shape index: {}]
  %s12 = sld [smem:[#allocation0]]
  $region78: #{tpu_custom_call.1} parent=0
    _
  %s14 = ssub.s32 1, %s12
  %s15 = scalar_select 0, %s14, %s12
  $region1: #{tpu_custom_call.1} parent=0
    #allocation2 [shape = 'u8[4096]{0}', space=vmem, size = 0x1000, scoped, tag = 'input window, operand 0, single buffered']
    #allocation3 [shape = 's32[1]{0}', space=sflag, size = 0x4, scoped, tag = 'scoped memory for tpu_custom_call.1']
    #allocation4 [shape = 's32[1]{0}', space=sflag, size = 0x4, scoped, tag = 'scoped memory for tpu_custom_call.1']
    #allocation5 [shape = 'u8[131072]{0}', space=vmem, size = 0x20000, scoped, tag = 'input window, operand 1, single buffered']
    #allocation6 [shape = 's32[1]{0}', space=sflag, size = 0x4, scoped, tag = 'scoped memory for tpu_custom_call.1']
    #allocation7 [shape = 'u8[131072]{0}', space=vmem, size = 0x20000, scoped, tag = 'input window, operand 3, single buffered']
    #allocation8 [shape = 'u8[131072]{0}', space=vmem, size = 0x20000, scoped, tag = 'input window, operand 5, single buffered']
    #allocation9 [shape = 's32[1]{0}', space=sflag, size = 0x4, scoped, tag = 'scoped memory for tpu_custom_call.1']
    #allocation10 [shape = 'u8[65536]{0}', space=vmem, size = 0x10000, scoped, tag = 'input window, operand 7, single buffered']
    #allocation11 [shape = 'u8[32768]{0}', space=vmem, size = 0x8000, scoped, tag = 'input window, operand 9, single buffered']
    #allocation12 [shape = 's32[1]{0}', space=sflag, size = 0x4, scoped, tag = 'scoped memory for tpu_custom_call.1']
    #allocation13 [shape = 'u8[4096]{0}', space=vmem, size = 0x1000, scoped, tag = 'output window, operand 0, single buffered']
    %16 = vsyncpa [#allocation3], 0
    %17 = vsyncpa [#allocation6], 0
    %18 = vsyncpa [#allocation9], 0
    %19 = vsyncpa [#allocation12], 0
    %20 = vsyncpa [#allocation4], 0
    // Predicated region
    $region2: #{tpu_custom_call.1} parent=1 // pred_check
      _
    $region3: #{tpu_custom_call.1} parent=1 // pred_check_branch
      %22 = sbr.rel (0) target = $region5
    $region4: #{tpu_custom_call.1} parent=1 // pred_region
      %s24 = ssub.s32 128, 128
      %25 = vsyncadd [#allocation3], %s24
      %s27 = sshll.u32 [#allocation2], 4
      %s28 = int_to_ptr.vmem [resolvable:$true] %s27
      %30 = dma.hbm_to_vmem [thread:$0]  %s0, 128, %s28, [#allocation3]
    $region5: #{tpu_custom_call.1} parent=1 // pred_fallthru
      _
    // Predicated region
    $region6: #{tpu_custom_call.1} parent=1 // pred_check
      _
    $region7: #{tpu_custom_call.1} parent=1 // pred_check_branch
      %32 = sbr.rel (0) target = $region9
    $region8: #{tpu_custom_call.1} parent=1 // pred_region
      %s34 = ssub.s32 4096, 4096
      %35 = vsyncadd [#allocation6], %s34
      %s36 = sshll.u32 [#allocation5], 4
      %s37 = int_to_ptr.vmem [resolvable:$true] %s36
      %42 = dma.hbm_to_vmem [thread:$0]  %s1, 4096, %s37, [#allocation6], 128, 128, 8
    $region9: #{tpu_custom_call.1} parent=1 // pred_fallthru
      _
    // Predicated region
    $region10: #{tpu_custom_call.1} parent=1 // pred_check
      _
    $region11: #{tpu_custom_call.1} parent=1 // pred_check_branch
      %44 = sbr.rel (0) target = $region13
    $region12: #{tpu_custom_call.1} parent=1 // pred_region
      _
    $region13: #{tpu_custom_call.1} parent=1 // pred_fallthru
      _
    // Predicated region
    $region14: #{tpu_custom_call.1} parent=1 // pred_check
      _
    $region15: #{tpu_custom_call.1} parent=1 // pred_check_branch
      %46 = sbr.rel (0) target = $region17
    $region16: #{tpu_custom_call.1} parent=1 // pred_region
      %s48 = ssub.s32 4096, 4096
      %49 = vsyncadd [#allocation6], %s48
      %s50 = sshll.u32 [#allocation7], 4
      %s51 = int_to_ptr.vmem [resolvable:$true] %s50
      %56 = dma.hbm_to_vmem [thread:$0]  %s3, 4096, %s51, [#allocation6], 128, 128, 8
    $region17: #{tpu_custom_call.1} parent=1 // pred_fallthru
      _
    // Predicated region
    $region18: #{tpu_custom_call.1} parent=1 // pred_check
      _
    $region19: #{tpu_custom_call.1} parent=1 // pred_check_branch
      %58 = sbr.rel (0) target = $region21
    $region20: #{tpu_custom_call.1} parent=1 // pred_region
      _
    $region21: #{tpu_custom_call.1} parent=1 // pred_fallthru
      _
    // Predicated region
    $region22: #{tpu_custom_call.1} parent=1 // pred_check
      _
    $region23: #{tpu_custom_call.1} parent=1 // pred_check_branch
      %60 = sbr.rel (0) target = $region25
    $region24: #{tpu_custom_call.1} parent=1 // pred_region
      %s62 = ssub.s32 4096, 4096
      %63 = vsyncadd [#allocation9], %s62
      %s64 = sshll.u32 [#allocation8], 4
      %s65 = int_to_ptr.vmem [resolvable:$true] %s64
      %70 = dma.hbm_to_vmem [thread:$0]  %s5, 4096, %s65, [#allocation9], 128, 128, 8
    $region25: #{tpu_custom_call.1} parent=1 // pred_fallthru
      _
    // Predicated region
    $region26: #{tpu_custom_call.1} parent=1 // pred_check
      _
    $region27: #{tpu_custom_call.1} parent=1 // pred_check_branch
      %72 = sbr.rel (0) target = $region29
    $region28: #{tpu_custom_call.1} parent=1 // pred_region
      _
    $region29: #{tpu_custom_call.1} parent=1 // pred_fallthru
      _
    // Predicated region
    $region30: #{tpu_custom_call.1} parent=1 // pred_check
      _
    $region31: #{tpu_custom_call.1} parent=1 // pred_check_branch
      %74 = sbr.rel (0) target = $region33
    $region32: #{tpu_custom_call.1} parent=1 // pred_region
      %s76 = ssub.s32 2048, 2048
      %77 = vsyncadd [#allocation9], %s76
      %s78 = sshll.u32 [#allocation10], 4
      %s79 = int_to_ptr.vmem [resolvable:$true] %s78
      %84 = dma.hbm_to_vmem [thread:$0]  %s7, 2048, %s79, [#allocation9], 64, 64, 4
    $region33: #{tpu_custom_call.1} parent=1 // pred_fallthru
      _
    // Predicated region
    $region34: #{tpu_custom_call.1} parent=1 // pred_check
      _
    $region35: #{tpu_custom_call.1} parent=1 // pred_check_branch
      %86 = sbr.rel (0) target = $region37
    $region36: #{tpu_custom_call.1} parent=1 // pred_region
      _
    $region37: #{tpu_custom_call.1} parent=1 // pred_fallthru
      _
    // Predicated region
    $region38: #{tpu_custom_call.1} parent=1 // pred_check
      _
    $region39: #{tpu_custom_call.1} parent=1 // pred_check_branch
      %88 = sbr.rel (0) target = $region41
    $region40: #{tpu_custom_call.1} parent=1 // pred_region
      %s90 = ssub.s32 1024, 1024
      %91 = vsyncadd [#allocation12], %s90
      %s92 = sshll.u32 [#allocation11], 4
      %s93 = int_to_ptr.vmem [resolvable:$true] %s92
      %98 = dma.hbm_to_vmem [thread:$0]  %s9, 1024, %s93, [#allocation12], 64, 64, 4
    $region41: #{tpu_custom_call.1} parent=1 // pred_fallthru
      _
    // Predicated region
    $region42: #{tpu_custom_call.1} parent=1 // pred_check
      _
    $region43: #{tpu_custom_call.1} parent=1 // pred_check_branch
      %100 = sbr.rel (0) target = $region45
    $region44: #{tpu_custom_call.1} parent=1 // pred_region
      _
    $region45: #{tpu_custom_call.1} parent=1 // pred_fallthru
      _
    // Predicated region
    $region46: #{tpu_custom_call.1} parent=1 // pred_check
      _
    $region47: #{tpu_custom_call.1} parent=1 // pred_check_branch
      %102 = sbr.rel (0) target = $region49
    $region48: #{tpu_custom_call.1} parent=1 // pred_region
      %103 = dma.done [#allocation3], 128
    $region49: #{tpu_custom_call.1} parent=1 // pred_fallthru
      _
    // Predicated region
    $region50: #{tpu_custom_call.1} parent=1 // pred_check
      _
    $region51: #{tpu_custom_call.1} parent=1 // pred_check_branch
      %105 = sbr.rel (0) target = $region53
    $region52: #{tpu_custom_call.1} parent=1 // pred_region
      %106 = dma.done [#allocation6], 4096
    $region53: #{tpu_custom_call.1} parent=1 // pred_fallthru
      _
    // Predicated region
    $region54: #{tpu_custom_call.1} parent=1 // pred_check
      _
    $region55: #{tpu_custom_call.1} parent=1 // pred_check_branch
      %108 = sbr.rel (0) target = $region57
    $region56: #{tpu_custom_call.1} parent=1 // pred_region
      %109 = dma.done [#allocation6], 4096
    $region57: #{tpu_custom_call.1} parent=1 // pred_fallthru
      _
    // Predicated region
    $region58: #{tpu_custom_call.1} parent=1 // pred_check
      _
    $region59: #{tpu_custom_call.1} parent=1 // pred_check_branch
      %111 = sbr.rel (0) target = $region61
    $region60: #{tpu_custom_call.1} parent=1 // pred_region
      %112 = dma.done [#allocation9], 4096
    $region61: #{tpu_custom_call.1} parent=1 // pred_fallthru
      _
    // Predicated region
    $region62: #{tpu_custom_call.1} parent=1 // pred_check
      _
    $region63: #{tpu_custom_call.1} parent=1 // pred_check_branch
      %114 = sbr.rel (0) target = $region65
    $region64: #{tpu_custom_call.1} parent=1 // pred_region
      %115 = dma.done [#allocation9], 2048
    $region65: #{tpu_custom_call.1} parent=1 // pred_fallthru
      _
    // Predicated region
    $region66: #{tpu_custom_call.1} parent=1 // pred_check
      _
    $region67: #{tpu_custom_call.1} parent=1 // pred_check_branch
      %117 = sbr.rel (0) target = $region69
    $region68: #{tpu_custom_call.1} parent=1 // pred_region
      %118 = dma.done [#allocation12], 1024
    $region69: #{tpu_custom_call.1} parent=1 // pred_fallthru
      _
    %v120 = vld [vmem:[#allocation2] sm:$0xff]
    %v121 = vld [vmem:[#allocation5] sm:$0xff]
    %v122 = vld [vmem:[#allocation5 + $0x8] sm:$0xff]
    %v123 = vld [vmem:[#allocation5 + $0x10] sm:$0xff]
    %v124 = vld [vmem:[#allocation5 + $0x18] sm:$0xff]
    %v125 = vld [vmem:[#allocation5 + $0x20] sm:$0xff]
    %v126 = vld [vmem:[#allocation5 + $0x28] sm:$0xff]
    %v127 = vld [vmem:[#allocation5 + $0x30] sm:$0xff]
    %v128 = vld [vmem:[#allocation5 + $0x38] sm:$0xff]
    %v129 = vld [vmem:[#allocation5 + $0x40] sm:$0xff]
    %v130 = vld [vmem:[#allocation5 + $0x48] sm:$0xff]
    %v131 = vld [vmem:[#allocation5 + $0x50] sm:$0xff]
    %v132 = vld [vmem:[#allocation5 + $0x58] sm:$0xff]
    %v133 = vld [vmem:[#allocation5 + $0x60] sm:$0xff]
    %v134 = vld [vmem:[#allocation5 + $0x68] sm:$0xff]
    %v135 = vld [vmem:[#allocation5 + $0x70] sm:$0xff]
    %v136 = vld [vmem:[#allocation5 + $0x78] sm:$0xff]
    %v137 = vld [vmem:[#allocation5 + $0x80] sm:$0xff]
    %v138 = vld [vmem:[#allocation5 + $0x88] sm:$0xff]
    %v139 = vld [vmem:[#allocation5 + $0x90] sm:$0xff]
    %v140 = vld [vmem:[#allocation5 + $0x98] sm:$0xff]
    %v141 = vld [vmem:[#allocation5 + $0xa0] sm:$0xff]
    %v142 = vld [vmem:[#allocation5 + $0xa8] sm:$0xff]
    %v143 = vld [vmem:[#allocation5 + $0xb0] sm:$0xff]
    %v144 = vld [vmem:[#allocation5 + $0xb8] sm:$0xff]
    %v145 = vld [vmem:[#allocation5 + $0xc0] sm:$0xff]
    %v146 = vld [vmem:[#allocation5 + $0xc8] sm:$0xff]
    %v147 = vld [vmem:[#allocation5 + $0xd0] sm:$0xff]
    %v148 = vld [vmem:[#allocation5 + $0xd8] sm:$0xff]
    %v149 = vld [vmem:[#allocation5 + $0xe0] sm:$0xff]
    %v150 = vld [vmem:[#allocation5 + $0xe8] sm:$0xff]
    %v151 = vld [vmem:[#allocation5 + $0xf0] sm:$0xff]
    %v152 = vld [vmem:[#allocation5 + $0xf8] sm:$0xff]
    %v154 = vunpack.c.l.b16 %v120
    %v155 = vunpack.c.h.b16 %v120
    %v156 = vpack.c.b16 %v154, %v154
    %v157 = vpack.c.b16 %v155, %v155
    %v192 = vunpack.c.l.b16 %v121
    %v193 = vunpack.c.h.b16 %v121
    %v194 = vunpack.c.l.b16 %v122
    %v195 = vunpack.c.h.b16 %v122
    %v196 = vunpack.c.l.b16 %v123
    %v197 = vunpack.c.h.b16 %v123
    %v198 = vunpack.c.l.b16 %v124
    %v199 = vunpack.c.h.b16 %v124
    %v200 = vunpack.c.l.b16 %v125
    %v201 = vunpack.c.h.b16 %v125
    %v202 = vunpack.c.l.b16 %v126
    %v203 = vunpack.c.h.b16 %v126
    %v204 = vunpack.c.l.b16 %v127
    %v205 = vunpack.c.h.b16 %v127
    %v206 = vunpack.c.l.b16 %v128
    %v207 = vunpack.c.h.b16 %v128
    %v208 = vunpack.c.l.b16 %v129
    %v209 = vunpack.c.h.b16 %v129
    %v210 = vunpack.c.l.b16 %v130
    %v211 = vunpack.c.h.b16 %v130
    %v212 = vunpack.c.l.b16 %v131
    %v213 = vunpack.c.h.b16 %v131
    %v214 = vunpack.c.l.b16 %v132
    %v215 = vunpack.c.h.b16 %v132
    %v216 = vunpack.c.l.b16 %v133
    %v217 = vunpack.c.h.b16 %v133
    %v218 = vunpack.c.l.b16 %v134
    %v219 = vunpack.c.h.b16 %v134
    %v220 = vunpack.c.l.b16 %v135
    %v221 = vunpack.c.h.b16 %v135
    %v222 = vunpack.c.l.b16 %v136
    %v223 = vunpack.c.h.b16 %v136
    %v224 = vunpack.c.l.b16 %v137
    %v225 = vunpack.c.h.b16 %v137
    %v226 = vunpack.c.l.b16 %v138
    %v227 = vunpack.c.h.b16 %v138
    %v228 = vunpack.c.l.b16 %v139
    %v229 = vunpack.c.h.b16 %v139
    %v230 = vunpack.c.l.b16 %v140
    %v231 = vunpack.c.h.b16 %v140
    %v232 = vunpack.c.l.b16 %v141
    %v233 = vunpack.c.h.b16 %v141
    %v234 = vunpack.c.l.b16 %v142
    %v235 = vunpack.c.h.b16 %v142
    %v236 = vunpack.c.l.b16 %v143
    %v237 = vunpack.c.h.b16 %v143
    %v238 = vunpack.c.l.b16 %v144
    %v239 = vunpack.c.h.b16 %v144
    %v240 = vunpack.c.l.b16 %v145
    %v241 = vunpack.c.h.b16 %v145
    %v242 = vunpack.c.l.b16 %v146
    %v243 = vunpack.c.h.b16 %v146
    %v244 = vunpack.c.l.b16 %v147
    %v245 = vunpack.c.h.b16 %v147
    %v246 = vunpack.c.l.b16 %v148
    %v247 = vunpack.c.h.b16 %v148
    %v248 = vunpack.c.l.b16 %v149
    %v249 = vunpack.c.h.b16 %v149
    %v250 = vunpack.c.l.b16 %v150
    %v251 = vunpack.c.h.b16 %v150
    %v252 = vunpack.c.l.b16 %v151
    %v253 = vunpack.c.h.b16 %v151
    %v254 = vunpack.c.l.b16 %v152
    %v255 = vunpack.c.h.b16 %v152
    %v256 = vpack.c.b16 %v194, %v192
    %v257 = vpack.c.b16 %v195, %v193
    %v258 = vpack.c.b16 %v198, %v196
    %v259 = vpack.c.b16 %v199, %v197
    %v260 = vpack.c.b16 %v202, %v200
    %v261 = vpack.c.b16 %v203, %v201
    %v262 = vpack.c.b16 %v206, %v204
    %v263 = vpack.c.b16 %v207, %v205
    %v264 = vpack.c.b16 %v210, %v208
    %v265 = vpack.c.b16 %v211, %v209
    %v266 = vpack.c.b16 %v214, %v212
    %v267 = vpack.c.b16 %v215, %v213
    %v268 = vpack.c.b16 %v218, %v216
    %v269 = vpack.c.b16 %v219, %v217
    %v270 = vpack.c.b16 %v222, %v220
    %v271 = vpack.c.b16 %v223, %v221
    %v272 = vpack.c.b16 %v226, %v224
    %v273 = vpack.c.b16 %v227, %v225
    %v274 = vpack.c.b16 %v230, %v228
    %v275 = vpack.c.b16 %v231, %v229
    %v276 = vpack.c.b16 %v234, %v232
    %v277 = vpack.c.b16 %v235, %v233
    %v278 = vpack.c.b16 %v238, %v236
    %v279 = vpack.c.b16 %v239, %v237
    %v280 = vpack.c.b16 %v242, %v240
    %v281 = vpack.c.b16 %v243, %v241
    %v282 = vpack.c.b16 %v246, %v244
    %v283 = vpack.c.b16 %v247, %v245
    %v284 = vpack.c.b16 %v250, %v248
    %v285 = vpack.c.b16 %v251, %v249
    %v286 = vpack.c.b16 %v254, %v252
    %v287 = vpack.c.b16 %v255, %v253
    %320 = vmatprep.subr.bf16.mxu0 %v257
    %321 = vmatpush1.bf16.msra.mxu0 %v256
    %322 = vmatprep.subr.bf16.mxu0 %v259
    %323 = vmatpush1.bf16.msra.mxu0 %v258
    %324 = vmatprep.subr.bf16.mxu0 %v261
    %325 = vmatpush1.bf16.msra.mxu0 %v260
    %326 = vmatprep.subr.bf16.mxu0 %v263
    %327 = vmatpush1.bf16.msra.mxu0 %v262
    %328 = vmatprep.subr.bf16.mxu0 %v265
    %329 = vmatpush1.bf16.msra.mxu0 %v264
    %330 = vmatprep.subr.bf16.mxu0 %v267
    %331 = vmatpush1.bf16.msra.mxu0 %v266
    %332 = vmatprep.subr.bf16.mxu0 %v269
    %333 = vmatpush1.bf16.msra.mxu0 %v268
    %334 = vmatprep.subr.bf16.mxu0 %v271
    %335 = vmatpush1.bf16.msra.mxu0 %v270
    %336 = vmatprep.subr.bf16.mxu0 %v273
    %337 = vmatpush1.bf16.msra.mxu0 %v272
    %338 = vmatprep.subr.bf16.mxu0 %v275
    %339 = vmatpush1.bf16.msra.mxu0 %v274
    %340 = vmatprep.subr.bf16.mxu0 %v277
    %341 = vmatpush1.bf16.msra.mxu0 %v276
    %342 = vmatprep.subr.bf16.mxu0 %v279
    %343 = vmatpush1.bf16.msra.mxu0 %v278
    %344 = vmatprep.subr.bf16.mxu0 %v281
    %345 = vmatpush1.bf16.msra.mxu0 %v280
    %346 = vmatprep.subr.bf16.mxu0 %v283
    %347 = vmatpush1.bf16.msra.mxu0 %v282
    %348 = vmatprep.subr.bf16.mxu0 %v285
    %349 = vmatpush1.bf16.msra.mxu0 %v284
    %350 = vmatprep.subr.bf16.mxu0 %v287
    %351 = vmatpush1.bf16.msra.mxu0 %v286
    %352 = vmatprep.mubr.bf16.mxu0 %v157
    %353 = vmatmul.mubr.bf16.gmra.mrb[0].mxu0 %v156
    %v354 = vpop.f32.mrb[0].mxu0
    %v355 = vadd.f32 0.0, %v354
    %v356 = vpop.f32.mrb[0].mxu0
    %v357 = vadd.f32 0.0, %v356
    %v358 = vpop.f32.mrb[0].mxu0
    %v359 = vpop.f32.mrb[0].mxu0
    %360 = vdwg.mxu0
    %v361 = vpack.c.bf16 %v355, %v355
    %v362 = vpack.c.bf16 %v357, %v357
    %v363 = vld [vmem:[%s2] sm:$0x3]
    %v366 = vunpack.c.l.s4 1966171168
    %v367 = vunpack.c.0.s8 %v366
    %v368 = vlaneseq
    %v369 = vshrl.u32 %v368, 7
    %v370 = vsub.s32 %v367, %v369
    %v371 = vrot.slane %v363, %v370
    %v372 = vcombine.high %v371, %v371
    %v374 = vunpack.c.l.s4 1966171168
    %v375 = vunpack.c.0.s8 %v374
    %v376 = vlaneseq
    %v377 = vshrl.u32 %v376, 7
    %v378 = vsub.s32 %v375, %v377
    %v379 = vrot.slane %v371, %v378
    %v381 = vunpack.c.l.s4 1966171168
    %v382 = vunpack.c.0.s8 %v381
    %v383 = vlaneseq
    %v384 = vshrl.u32 %v383, 7
    %v385 = vsub.s32 %v382, %v384
    %v386 = vrot.slane %v372, %v385
    %v388 = vpack.i.b16 %v379, %v379
    %v390 = vlaneseq
    %v391 = vshrl.u32 %v390, 7
    %v392 = vsub.s32 0, %v391
    %v393 = vrot.slane %v388, %v392
    %v395 = vpack.i.b16 %v386, %v386
    %v397 = vlaneseq
    %v398 = vshrl.u32 %v397, 7
    %v399 = vsub.s32 0, %v398
    %v400 = vrot.slane %v395, %v399
    %v401 = vadd.bf16 %v361, %v393
    %v402 = vadd.bf16 %v362, %v400
    %v403 = vmax.bf16 %v401, 0
    %v404 = vmax.bf16 %v402, 0
    %v405 = vld [vmem:[#allocation7] sm:$0xff]
    %v406 = vld [vmem:[#allocation7 + $0x8] sm:$0xff]
    %v407 = vld [vmem:[#allocation7 + $0x10] sm:$0xff]
    %v408 = vld [vmem:[#allocation7 + $0x18] sm:$0xff]
    %v409 = vld [vmem:[#allocation7 + $0x20] sm:$0xff]
    %v410 = vld [vmem:[#allocation7 + $0x28] sm:$0xff]
    %v411 = vld [vmem:[#allocation7 + $0x30] sm:$0xff]
    %v412 = vld [vmem:[#allocation7 + $0x38] sm:$0xff]
    %v413 = vld [vmem:[#allocation7 + $0x40] sm:$0xff]
    %v414 = vld [vmem:[#allocation7 + $0x48] sm:$0xff]
    %v415 = vld [vmem:[#allocation7 + $0x50] sm:$0xff]
    %v416 = vld [vmem:[#allocation7 + $0x58] sm:$0xff]
    %v417 = vld [vmem:[#allocation7 + $0x60] sm:$0xff]
    %v418 = vld [vmem:[#allocation7 + $0x68] sm:$0xff]
    %v419 = vld [vmem:[#allocation7 + $0x70] sm:$0xff]
    %v420 = vld [vmem:[#allocation7 + $0x78] sm:$0xff]
    %v421 = vld [vmem:[#allocation7 + $0x80] sm:$0xff]
    %v422 = vld [vmem:[#allocation7 + $0x88] sm:$0xff]
    %v423 = vld [vmem:[#allocation7 + $0x90] sm:$0xff]
    %v424 = vld [vmem:[#allocation7 + $0x98] sm:$0xff]
    %v425 = vld [vmem:[#allocation7 + $0xa0] sm:$0xff]
    %v426 = vld [vmem:[#allocation7 + $0xa8] sm:$0xff]
    %v427 = vld [vmem:[#allocation7 + $0xb0] sm:$0xff]
    %v428 = vld [vmem:[#allocation7 + $0xb8] sm:$0xff]
    %v429 = vld [vmem:[#allocation7 + $0xc0] sm:$0xff]
    %v430 = vld [vmem:[#allocation7 + $0xc8] sm:$0xff]
    %v431 = vld [vmem:[#allocation7 + $0xd0] sm:$0xff]
    %v432 = vld [vmem:[#allocation7 + $0xd8] sm:$0xff]
    %v433 = vld [vmem:[#allocation7 + $0xe0] sm:$0xff]
    %v434 = vld [vmem:[#allocation7 + $0xe8] sm:$0xff]
    %v435 = vld [vmem:[#allocation7 + $0xf0] sm:$0xff]
    %v436 = vld [vmem:[#allocation7 + $0xf8] sm:$0xff]
    %v469 = vunpack.c.l.b16 %v405
    %v470 = vunpack.c.h.b16 %v405
    %v471 = vunpack.c.l.b16 %v406
    %v472 = vunpack.c.h.b16 %v406
    %v473 = vunpack.c.l.b16 %v407
    %v474 = vunpack.c.h.b16 %v407
    %v475 = vunpack.c.l.b16 %v408
    %v476 = vunpack.c.h.b16 %v408
    %v477 = vunpack.c.l.b16 %v409
    %v478 = vunpack.c.h.b16 %v409
    %v479 = vunpack.c.l.b16 %v410
    %v480 = vunpack.c.h.b16 %v410
    %v481 = vunpack.c.l.b16 %v411
    %v482 = vunpack.c.h.b16 %v411
    %v483 = vunpack.c.l.b16 %v412
    %v484 = vunpack.c.h.b16 %v412
    %v485 = vunpack.c.l.b16 %v413
    %v486 = vunpack.c.h.b16 %v413
    %v487 = vunpack.c.l.b16 %v414
    %v488 = vunpack.c.h.b16 %v414
    %v489 = vunpack.c.l.b16 %v415
    %v490 = vunpack.c.h.b16 %v415
    %v491 = vunpack.c.l.b16 %v416
    %v492 = vunpack.c.h.b16 %v416
    %v493 = vunpack.c.l.b16 %v417
    %v494 = vunpack.c.h.b16 %v417
    %v495 = vunpack.c.l.b16 %v418
    %v496 = vunpack.c.h.b16 %v418
    %v497 = vunpack.c.l.b16 %v419
    %v498 = vunpack.c.h.b16 %v419
    %v499 = vunpack.c.l.b16 %v420
    %v500 = vunpack.c.h.b16 %v420
    %v501 = vunpack.c.l.b16 %v421
    %v502 = vunpack.c.h.b16 %v421
    %v503 = vunpack.c.l.b16 %v422
    %v504 = vunpack.c.h.b16 %v422
    %v505 = vunpack.c.l.b16 %v423
    %v506 = vunpack.c.h.b16 %v423
    %v507 = vunpack.c.l.b16 %v424
    %v508 = vunpack.c.h.b16 %v424
    %v509 = vunpack.c.l.b16 %v425
    %v510 = vunpack.c.h.b16 %v425
    %v511 = vunpack.c.l.b16 %v426
    %v512 = vunpack.c.h.b16 %v426
    %v513 = vunpack.c.l.b16 %v427
    %v514 = vunpack.c.h.b16 %v427
    %v515 = vunpack.c.l.b16 %v428
    %v516 = vunpack.c.h.b16 %v428
    %v517 = vunpack.c.l.b16 %v429
    %v518 = vunpack.c.h.b16 %v429
    %v519 = vunpack.c.l.b16 %v430
    %v520 = vunpack.c.h.b16 %v430
    %v521 = vunpack.c.l.b16 %v431
    %v522 = vunpack.c.h.b16 %v431
    %v523 = vunpack.c.l.b16 %v432
    %v524 = vunpack.c.h.b16 %v432
    %v525 = vunpack.c.l.b16 %v433
    %v526 = vunpack.c.h.b16 %v433
    %v527 = vunpack.c.l.b16 %v434
    %v528 = vunpack.c.h.b16 %v434
    %v529 = vunpack.c.l.b16 %v435
    %v530 = vunpack.c.h.b16 %v435
    %v531 = vunpack.c.l.b16 %v436
    %v532 = vunpack.c.h.b16 %v436
    %v533 = vpack.c.b16 %v471, %v469
    %v534 = vpack.c.b16 %v472, %v470
    %v535 = vpack.c.b16 %v475, %v473
    %v536 = vpack.c.b16 %v476, %v474
    %v537 = vpack.c.b16 %v479, %v477
    %v538 = vpack.c.b16 %v480, %v478
    %v539 = vpack.c.b16 %v483, %v481
    %v540 = vpack.c.b16 %v484, %v482
    %v541 = vpack.c.b16 %v487, %v485
    %v542 = vpack.c.b16 %v488, %v486
    %v543 = vpack.c.b16 %v491, %v489
    %v544 = vpack.c.b16 %v492, %v490
    %v545 = vpack.c.b16 %v495, %v493
    %v546 = vpack.c.b16 %v496, %v494
    %v547 = vpack.c.b16 %v499, %v497
    %v548 = vpack.c.b16 %v500, %v498
    %v549 = vpack.c.b16 %v503, %v501
    %v550 = vpack.c.b16 %v504, %v502
    %v551 = vpack.c.b16 %v507, %v505
    %v552 = vpack.c.b16 %v508, %v506
    %v553 = vpack.c.b16 %v511, %v509
    %v554 = vpack.c.b16 %v512, %v510
    %v555 = vpack.c.b16 %v515, %v513
    %v556 = vpack.c.b16 %v516, %v514
    %v557 = vpack.c.b16 %v519, %v517
    %v558 = vpack.c.b16 %v520, %v518
    %v559 = vpack.c.b16 %v523, %v521
    %v560 = vpack.c.b16 %v524, %v522
    %v561 = vpack.c.b16 %v527, %v525
    %v562 = vpack.c.b16 %v528, %v526
    %v563 = vpack.c.b16 %v531, %v529
    %v564 = vpack.c.b16 %v532, %v530
    %597 = vmatprep.subr.bf16.mxu0 %v534
    %598 = vmatpush1.bf16.msra.mxu0 %v533
    %599 = vmatprep.subr.bf16.mxu0 %v536
    %600 = vmatpush1.bf16.msra.mxu0 %v535
    %601 = vmatprep.subr.bf16.mxu0 %v538
    %602 = vmatpush1.bf16.msra.mxu0 %v537
    %603 = vmatprep.subr.bf16.mxu0 %v540
    %604 = vmatpush1.bf16.msra.mxu0 %v539
    %605 = vmatprep.subr.bf16.mxu0 %v542
    %606 = vmatpush1.bf16.msra.mxu0 %v541
    %607 = vmatprep.subr.bf16.mxu0 %v544
    %608 = vmatpush1.bf16.msra.mxu0 %v543
    %609 = vmatprep.subr.bf16.mxu0 %v546
    %610 = vmatpush1.bf16.msra.mxu0 %v545
    %611 = vmatprep.subr.bf16.mxu0 %v548
    %612 = vmatpush1.bf16.msra.mxu0 %v547
    %613 = vmatprep.subr.bf16.mxu0 %v550
    %614 = vmatpush1.bf16.msra.mxu0 %v549
    %615 = vmatprep.subr.bf16.mxu0 %v552
    %616 = vmatpush1.bf16.msra.mxu0 %v551
    %617 = vmatprep.subr.bf16.mxu0 %v554
    %618 = vmatpush1.bf16.msra.mxu0 %v553
    %619 = vmatprep.subr.bf16.mxu0 %v556
    %620 = vmatpush1.bf16.msra.mxu0 %v555
    %621 = vmatprep.subr.bf16.mxu0 %v558
    %622 = vmatpush1.bf16.msra.mxu0 %v557
    %623 = vmatprep.subr.bf16.mxu0 %v560
    %624 = vmatpush1.bf16.msra.mxu0 %v559
    %625 = vmatprep.subr.bf16.mxu0 %v562
    %626 = vmatpush1.bf16.msra.mxu0 %v561
    %627 = vmatprep.subr.bf16.mxu0 %v564
    %628 = vmatpush1.bf16.msra.mxu0 %v563
    %629 = vmatprep.mubr.bf16.mxu0 %v404
    %630 = vmatmul.mubr.bf16.gmra.mrb[0].mxu0 %v403
    %v631 = vpop.f32.mrb[0].mxu0
    %v632 = vadd.f32 0.0, %v631
    %v633 = vpop.f32.mrb[0].mxu0
    %v634 = vadd.f32 0.0, %v633
    %v635 = vpop.f32.mrb[0].mxu0
    %v636 = vpop.f32.mrb[0].mxu0
    %637 = vdwg.mxu0
    %v638 = vpack.c.bf16 %v632, %v632
    %v639 = vpack.c.bf16 %v634, %v634
    %v640 = vld [vmem:[%s4] sm:$0x3]
    %v643 = vunpack.c.l.s4 1966171168
    %v644 = vunpack.c.0.s8 %v643
    %v645 = vlaneseq
    %v646 = vshrl.u32 %v645, 7
    %v647 = vsub.s32 %v644, %v646
    %v648 = vrot.slane %v640, %v647
    %v649 = vcombine.high %v648, %v648
    %v651 = vunpack.c.l.s4 1966171168
    %v652 = vunpack.c.0.s8 %v651
    %v653 = vlaneseq
    %v654 = vshrl.u32 %v653, 7
    %v655 = vsub.s32 %v652, %v654
    %v656 = vrot.slane %v648, %v655
    %v658 = vunpack.c.l.s4 1966171168
    %v659 = vunpack.c.0.s8 %v658
    %v660 = vlaneseq
    %v661 = vshrl.u32 %v660, 7
    %v662 = vsub.s32 %v659, %v661
    %v663 = vrot.slane %v649, %v662
    %v665 = vpack.i.b16 %v656, %v656
    %v667 = vlaneseq
    %v668 = vshrl.u32 %v667, 7
    %v669 = vsub.s32 0, %v668
    %v670 = vrot.slane %v665, %v669
    %v672 = vpack.i.b16 %v663, %v663
    %v674 = vlaneseq
    %v675 = vshrl.u32 %v674, 7
    %v676 = vsub.s32 0, %v675
    %v677 = vrot.slane %v672, %v676
    %v678 = vadd.bf16 %v638, %v670
    %v679 = vadd.bf16 %v639, %v677
    %v680 = vmax.bf16 %v678, 0
    %v681 = vmax.bf16 %v679, 0
    %v682 = vld [vmem:[#allocation8] sm:$0xff]
    %v683 = vld [vmem:[#allocation8 + $0x8] sm:$0xff]
    %v684 = vld [vmem:[#allocation8 + $0x10] sm:$0xff]
    %v685 = vld [vmem:[#allocation8 + $0x18] sm:$0xff]
    %v686 = vld [vmem:[#allocation8 + $0x20] sm:$0xff]
    %v687 = vld [vmem:[#allocation8 + $0x28] sm:$0xff]
    %v688 = vld [vmem:[#allocation8 + $0x30] sm:$0xff]
    %v689 = vld [vmem:[#allocation8 + $0x38] sm:$0xff]
    %v690 = vld [vmem:[#allocation8 + $0x40] sm:$0xff]
    %v691 = vld [vmem:[#allocation8 + $0x48] sm:$0xff]
    %v692 = vld [vmem:[#allocation8 + $0x50] sm:$0xff]
    %v693 = vld [vmem:[#allocation8 + $0x58] sm:$0xff]
    %v694 = vld [vmem:[#allocation8 + $0x60] sm:$0xff]
    %v695 = vld [vmem:[#allocation8 + $0x68] sm:$0xff]
    %v696 = vld [vmem:[#allocation8 + $0x70] sm:$0xff]
    %v697 = vld [vmem:[#allocation8 + $0x78] sm:$0xff]
    %v698 = vld [vmem:[#allocation8 + $0x80] sm:$0xff]
    %v699 = vld [vmem:[#allocation8 + $0x88] sm:$0xff]
    %v700 = vld [vmem:[#allocation8 + $0x90] sm:$0xff]
    %v701 = vld [vmem:[#allocation8 + $0x98] sm:$0xff]
    %v702 = vld [vmem:[#allocation8 + $0xa0] sm:$0xff]
    %v703 = vld [vmem:[#allocation8 + $0xa8] sm:$0xff]
    %v704 = vld [vmem:[#allocation8 + $0xb0] sm:$0xff]
    %v705 = vld [vmem:[#allocation8 + $0xb8] sm:$0xff]
    %v706 = vld [vmem:[#allocation8 + $0xc0] sm:$0xff]
    %v707 = vld [vmem:[#allocation8 + $0xc8] sm:$0xff]
    %v708 = vld [vmem:[#allocation8 + $0xd0] sm:$0xff]
    %v709 = vld [vmem:[#allocation8 + $0xd8] sm:$0xff]
    %v710 = vld [vmem:[#allocation8 + $0xe0] sm:$0xff]
    %v711 = vld [vmem:[#allocation8 + $0xe8] sm:$0xff]
    %v712 = vld [vmem:[#allocation8 + $0xf0] sm:$0xff]
    %v713 = vld [vmem:[#allocation8 + $0xf8] sm:$0xff]
    %v746 = vunpack.c.l.b16 %v682
    %v747 = vunpack.c.h.b16 %v682
    %v748 = vunpack.c.l.b16 %v683
    %v749 = vunpack.c.h.b16 %v683
    %v750 = vunpack.c.l.b16 %v684
    %v751 = vunpack.c.h.b16 %v684
    %v752 = vunpack.c.l.b16 %v685
    %v753 = vunpack.c.h.b16 %v685
    %v754 = vunpack.c.l.b16 %v686
    %v755 = vunpack.c.h.b16 %v686
    %v756 = vunpack.c.l.b16 %v687
    %v757 = vunpack.c.h.b16 %v687
    %v758 = vunpack.c.l.b16 %v688
    %v759 = vunpack.c.h.b16 %v688
    %v760 = vunpack.c.l.b16 %v689
    %v761 = vunpack.c.h.b16 %v689
    %v762 = vunpack.c.l.b16 %v690
    %v763 = vunpack.c.h.b16 %v690
    %v764 = vunpack.c.l.b16 %v691
    %v765 = vunpack.c.h.b16 %v691
    %v766 = vunpack.c.l.b16 %v692
    %v767 = vunpack.c.h.b16 %v692
    %v768 = vunpack.c.l.b16 %v693
    %v769 = vunpack.c.h.b16 %v693
    %v770 = vunpack.c.l.b16 %v694
    %v771 = vunpack.c.h.b16 %v694
    %v772 = vunpack.c.l.b16 %v695
    %v773 = vunpack.c.h.b16 %v695
    %v774 = vunpack.c.l.b16 %v696
    %v775 = vunpack.c.h.b16 %v696
    %v776 = vunpack.c.l.b16 %v697
    %v777 = vunpack.c.h.b16 %v697
    %v778 = vunpack.c.l.b16 %v698
    %v779 = vunpack.c.h.b16 %v698
    %v780 = vunpack.c.l.b16 %v699
    %v781 = vunpack.c.h.b16 %v699
    %v782 = vunpack.c.l.b16 %v700
    %v783 = vunpack.c.h.b16 %v700
    %v784 = vunpack.c.l.b16 %v701
    %v785 = vunpack.c.h.b16 %v701
    %v786 = vunpack.c.l.b16 %v702
    %v787 = vunpack.c.h.b16 %v702
    %v788 = vunpack.c.l.b16 %v703
    %v789 = vunpack.c.h.b16 %v703
    %v790 = vunpack.c.l.b16 %v704
    %v791 = vunpack.c.h.b16 %v704
    %v792 = vunpack.c.l.b16 %v705
    %v793 = vunpack.c.h.b16 %v705
    %v794 = vunpack.c.l.b16 %v706
    %v795 = vunpack.c.h.b16 %v706
    %v796 = vunpack.c.l.b16 %v707
    %v797 = vunpack.c.h.b16 %v707
    %v798 = vunpack.c.l.b16 %v708
    %v799 = vunpack.c.h.b16 %v708
    %v800 = vunpack.c.l.b16 %v709
    %v801 = vunpack.c.h.b16 %v709
    %v802 = vunpack.c.l.b16 %v710
    %v803 = vunpack.c.h.b16 %v710
    %v804 = vunpack.c.l.b16 %v711
    %v805 = vunpack.c.h.b16 %v711
    %v806 = vunpack.c.l.b16 %v712
    %v807 = vunpack.c.h.b16 %v712
    %v808 = vunpack.c.l.b16 %v713
    %v809 = vunpack.c.h.b16 %v713
    %v810 = vpack.c.b16 %v748, %v746
    %v811 = vpack.c.b16 %v749, %v747
    %v812 = vpack.c.b16 %v752, %v750
    %v813 = vpack.c.b16 %v753, %v751
    %v814 = vpack.c.b16 %v756, %v754
    %v815 = vpack.c.b16 %v757, %v755
    %v816 = vpack.c.b16 %v760, %v758
    %v817 = vpack.c.b16 %v761, %v759
    %v818 = vpack.c.b16 %v764, %v762
    %v819 = vpack.c.b16 %v765, %v763
    %v820 = vpack.c.b16 %v768, %v766
    %v821 = vpack.c.b16 %v769, %v767
    %v822 = vpack.c.b16 %v772, %v770
    %v823 = vpack.c.b16 %v773, %v771
    %v824 = vpack.c.b16 %v776, %v774
    %v825 = vpack.c.b16 %v777, %v775
    %v826 = vpack.c.b16 %v780, %v778
    %v827 = vpack.c.b16 %v781, %v779
    %v828 = vpack.c.b16 %v784, %v782
    %v829 = vpack.c.b16 %v785, %v783
    %v830 = vpack.c.b16 %v788, %v786
    %v831 = vpack.c.b16 %v789, %v787
    %v832 = vpack.c.b16 %v792, %v790
    %v833 = vpack.c.b16 %v793, %v791
    %v834 = vpack.c.b16 %v796, %v794
    %v835 = vpack.c.b16 %v797, %v795
    %v836 = vpack.c.b16 %v800, %v798
    %v837 = vpack.c.b16 %v801, %v799
    %v838 = vpack.c.b16 %v804, %v802
    %v839 = vpack.c.b16 %v805, %v803
    %v840 = vpack.c.b16 %v808, %v806
    %v841 = vpack.c.b16 %v809, %v807
    %874 = vmatprep.subr.bf16.mxu0 %v811
    %875 = vmatpush1.bf16.msra.mxu0 %v810
    %876 = vmatprep.subr.bf16.mxu0 %v813
    %877 = vmatpush1.bf16.msra.mxu0 %v812
    %878 = vmatprep.subr.bf16.mxu0 %v815
    %879 = vmatpush1.bf16.msra.mxu0 %v814
    %880 = vmatprep.subr.bf16.mxu0 %v817
    %881 = vmatpush1.bf16.msra.mxu0 %v816
    %882 = vmatprep.subr.bf16.mxu0 %v819
    %883 = vmatpush1.bf16.msra.mxu0 %v818
    %884 = vmatprep.subr.bf16.mxu0 %v821
    %885 = vmatpush1.bf16.msra.mxu0 %v820
    %886 = vmatprep.subr.bf16.mxu0 %v823
    %887 = vmatpush1.bf16.msra.mxu0 %v822
    %888 = vmatprep.subr.bf16.mxu0 %v825
    %889 = vmatpush1.bf16.msra.mxu0 %v824
    %890 = vmatprep.subr.bf16.mxu0 %v827
    %891 = vmatpush1.bf16.msra.mxu0 %v826
    %892 = vmatprep.subr.bf16.mxu0 %v829
    %893 = vmatpush1.bf16.msra.mxu0 %v828
    %894 = vmatprep.subr.bf16.mxu0 %v831
    %895 = vmatpush1.bf16.msra.mxu0 %v830
    %896 = vmatprep.subr.bf16.mxu0 %v833
    %897 = vmatpush1.bf16.msra.mxu0 %v832
    %898 = vmatprep.subr.bf16.mxu0 %v835
    %899 = vmatpush1.bf16.msra.mxu0 %v834
    %900 = vmatprep.subr.bf16.mxu0 %v837
    %901 = vmatpush1.bf16.msra.mxu0 %v836
    %902 = vmatprep.subr.bf16.mxu0 %v839
    %903 = vmatpush1.bf16.msra.mxu0 %v838
    %904 = vmatprep.subr.bf16.mxu0 %v841
    %905 = vmatpush1.bf16.msra.mxu0 %v840
    %906 = vmatprep.mubr.bf16.mxu0 %v681
    %907 = vmatmul.mubr.bf16.gmra.mrb[0].mxu0 %v680
    %v908 = vpop.f32.mrb[0].mxu0
    %v909 = vadd.f32 0.0, %v908
    %v910 = vpop.f32.mrb[0].mxu0
    %v911 = vadd.f32 0.0, %v910
    %v912 = vpop.f32.mrb[0].mxu0
    %v913 = vpop.f32.mrb[0].mxu0
    %914 = vdwg.mxu0
    %v915 = vpack.c.bf16 %v909, %v909
    %v916 = vpack.c.bf16 %v911, %v911
    %v917 = vld [vmem:[%s6] sm:$0x3]
    %v920 = vunpack.c.l.s4 1966171168
    %v921 = vunpack.c.0.s8 %v920
    %v922 = vlaneseq
    %v923 = vshrl.u32 %v922, 7
    %v924 = vsub.s32 %v921, %v923
    %v925 = vrot.slane %v917, %v924
    %v926 = vcombine.high %v925, %v925
    %v928 = vunpack.c.l.s4 1966171168
    %v929 = vunpack.c.0.s8 %v928
    %v930 = vlaneseq
    %v931 = vshrl.u32 %v930, 7
    %v932 = vsub.s32 %v929, %v931
    %v933 = vrot.slane %v925, %v932
    %v935 = vunpack.c.l.s4 1966171168
    %v936 = vunpack.c.0.s8 %v935
    %v937 = vlaneseq
    %v938 = vshrl.u32 %v937, 7
    %v939 = vsub.s32 %v936, %v938
    %v940 = vrot.slane %v926, %v939
    %v942 = vpack.i.b16 %v933, %v933
    %v944 = vlaneseq
    %v945 = vshrl.u32 %v944, 7
    %v946 = vsub.s32 0, %v945
    %v947 = vrot.slane %v942, %v946
    %v949 = vpack.i.b16 %v940, %v940
    %v951 = vlaneseq
    %v952 = vshrl.u32 %v951, 7
    %v953 = vsub.s32 0, %v952
    %v954 = vrot.slane %v949, %v953
    %v955 = vadd.bf16 %v915, %v947
    %v956 = vadd.bf16 %v916, %v954
    %v957 = vmax.bf16 %v955, 0
    %v958 = vmax.bf16 %v956, 0
    %v959 = vld [vmem:[#allocation10] sm:$0xf]
    %v960 = vld [vmem:[#allocation10 + $0x4] sm:$0xf]
    %v961 = vld [vmem:[#allocation10 + $0x8] sm:$0xf]
    %v962 = vld [vmem:[#allocation10 + $0xc] sm:$0xf]
    %v963 = vld [vmem:[#allocation10 + $0x10] sm:$0xf]
    %v964 = vld [vmem:[#allocation10 + $0x14] sm:$0xf]
    %v965 = vld [vmem:[#allocation10 + $0x18] sm:$0xf]
    %v966 = vld [vmem:[#allocation10 + $0x1c] sm:$0xf]
    %v967 = vld [vmem:[#allocation10 + $0x20] sm:$0xf]
    %v968 = vld [vmem:[#allocation10 + $0x24] sm:$0xf]
    %v969 = vld [vmem:[#allocation10 + $0x28] sm:$0xf]
    %v970 = vld [vmem:[#allocation10 + $0x2c] sm:$0xf]
    %v971 = vld [vmem:[#allocation10 + $0x30] sm:$0xf]
    %v972 = vld [vmem:[#allocation10 + $0x34] sm:$0xf]
    %v973 = vld [vmem:[#allocation10 + $0x38] sm:$0xf]
    %v974 = vld [vmem:[#allocation10 + $0x3c] sm:$0xf]
    %v975 = vld [vmem:[#allocation10 + $0x40] sm:$0xf]
    %v976 = vld [vmem:[#allocation10 + $0x44] sm:$0xf]
    %v977 = vld [vmem:[#allocation10 + $0x48] sm:$0xf]
    %v978 = vld [vmem:[#allocation10 + $0x4c] sm:$0xf]
    %v979 = vld [vmem:[#allocation10 + $0x50] sm:$0xf]
    %v980 = vld [vmem:[#allocation10 + $0x54] sm:$0xf]
    %v981 = vld [vmem:[#allocation10 + $0x58] sm:$0xf]
    %v982 = vld [vmem:[#allocation10 + $0x5c] sm:$0xf]
    %v983 = vld [vmem:[#allocation10 + $0x60] sm:$0xf]
    %v984 = vld [vmem:[#allocation10 + $0x64] sm:$0xf]
    %v985 = vld [vmem:[#allocation10 + $0x68] sm:$0xf]
    %v986 = vld [vmem:[#allocation10 + $0x6c] sm:$0xf]
    %v987 = vld [vmem:[#allocation10 + $0x70] sm:$0xf]
    %v988 = vld [vmem:[#allocation10 + $0x74] sm:$0xf]
    %v989 = vld [vmem:[#allocation10 + $0x78] sm:$0xf]
    %v990 = vld [vmem:[#allocation10 + $0x7c] sm:$0xf]
    %v1023 = vunpack.c.l.b16 %v959
    %v1024 = vunpack.c.l.b16 %v960
    %v1025 = vunpack.c.l.b16 %v961
    %v1026 = vunpack.c.l.b16 %v962
    %v1027 = vunpack.c.l.b16 %v963
    %v1028 = vunpack.c.l.b16 %v964
    %v1029 = vunpack.c.l.b16 %v965
    %v1030 = vunpack.c.l.b16 %v966
    %v1031 = vunpack.c.l.b16 %v967
    %v1032 = vunpack.c.l.b16 %v968
    %v1033 = vunpack.c.l.b16 %v969
    %v1034 = vunpack.c.l.b16 %v970
    %v1035 = vunpack.c.l.b16 %v971
    %v1036 = vunpack.c.l.b16 %v972
    %v1037 = vunpack.c.l.b16 %v973
    %v1038 = vunpack.c.l.b16 %v974
    %v1039 = vunpack.c.l.b16 %v975
    %v1040 = vunpack.c.l.b16 %v976
    %v1041 = vunpack.c.l.b16 %v977
    %v1042 = vunpack.c.l.b16 %v978
    %v1043 = vunpack.c.l.b16 %v979
    %v1044 = vunpack.c.l.b16 %v980
    %v1045 = vunpack.c.l.b16 %v981
    %v1046 = vunpack.c.l.b16 %v982
    %v1047 = vunpack.c.l.b16 %v983
    %v1048 = vunpack.c.l.b16 %v984
    %v1049 = vunpack.c.l.b16 %v985
    %v1050 = vunpack.c.l.b16 %v986
    %v1051 = vunpack.c.l.b16 %v987
    %v1052 = vunpack.c.l.b16 %v988
    %v1053 = vunpack.c.l.b16 %v989
    %v1054 = vunpack.c.l.b16 %v990
    %v1055 = vpack.c.b16 %v1024, %v1023
    %v1056 = vpack.c.b16 %v1026, %v1025
    %v1057 = vpack.c.b16 %v1028, %v1027
    %v1058 = vpack.c.b16 %v1030, %v1029
    %v1059 = vpack.c.b16 %v1032, %v1031
    %v1060 = vpack.c.b16 %v1034, %v1033
    %v1061 = vpack.c.b16 %v1036, %v1035
    %v1062 = vpack.c.b16 %v1038, %v1037
    %v1063 = vpack.c.b16 %v1040, %v1039
    %v1064 = vpack.c.b16 %v1042, %v1041
    %v1065 = vpack.c.b16 %v1044, %v1043
    %v1066 = vpack.c.b16 %v1046, %v1045
    %v1067 = vpack.c.b16 %v1048, %v1047
    %v1068 = vpack.c.b16 %v1050, %v1049
    %v1069 = vpack.c.b16 %v1052, %v1051
    %v1070 = vpack.c.b16 %v1054, %v1053
    %1087 = vmatprep.subr.bf16.mxu0 0
    %1088 = vmatpush1.bf16.msra.mxu0 %v1055
    %1089 = vmatprep.subr.bf16.mxu0 0
    %1090 = vmatpush1.bf16.msra.mxu0 %v1056
    %1091 = vmatprep.subr.bf16.mxu0 0
    %1092 = vmatpush1.bf16.msra.mxu0 %v1057
    %1093 = vmatprep.subr.bf16.mxu0 0
    %1094 = vmatpush1.bf16.msra.mxu0 %v1058
    %1095 = vmatprep.subr.bf16.mxu0 0
    %1096 = vmatpush1.bf16.msra.mxu0 %v1059
    %1097 = vmatprep.subr.bf16.mxu0 0
    %1098 = vmatpush1.bf16.msra.mxu0 %v1060
    %1099 = vmatprep.subr.bf16.mxu0 0
    %1100 = vmatpush1.bf16.msra.mxu0 %v1061
    %1101 = vmatprep.subr.bf16.mxu0 0
    %1102 = vmatpush1.bf16.msra.mxu0 %v1062
    %1103 = vmatprep.subr.bf16.mxu0 0
    %1104 = vmatpush1.bf16.msra.mxu0 %v1063
    %1105 = vmatprep.subr.bf16.mxu0 0
    %1106 = vmatpush1.bf16.msra.mxu0 %v1064
    %1107 = vmatprep.subr.bf16.mxu0 0
    %1108 = vmatpush1.bf16.msra.mxu0 %v1065
    %1109 = vmatprep.subr.bf16.mxu0 0
    %1110 = vmatpush1.bf16.msra.mxu0 %v1066
    %1111 = vmatprep.subr.bf16.mxu0 0
    %1112 = vmatpush1.bf16.msra.mxu0 %v1067
    %1113 = vmatprep.subr.bf16.mxu0 0
    %1114 = vmatpush1.bf16.msra.mxu0 %v1068
    %1115 = vmatprep.subr.bf16.mxu0 0
    %1116 = vmatpush1.bf16.msra.mxu0 %v1069
    %1117 = vmatprep.subr.bf16.mxu0 0
    %1118 = vmatpush1.bf16.msra.mxu0 %v1070
    %1119 = vmatprep.mubr.bf16.mxu0 %v958
    %1120 = vmatmul.mubr.bf16.gmra.mrb[0].mxu0 %v957
    %v1121 = vpop.f32.mrb[0].mxu0
    %v1122 = vadd.f32 0.0, %v1121
    %v1123 = vpop.f32.mrb[0].mxu0
    %v1124 = vpop.f32.mrb[0].mxu0
    %v1125 = vpop.f32.mrb[0].mxu0
    %1126 = vdwg.mxu0
    %v1127 = vpack.c.bf16 %v1122, %v1122
    %v1128 = vld [vmem:[%s8] sm:$0x1]
    %v1130 = vpack.i.b16 %v1128, %v1128
    %v1132 = vlaneseq
    %v1133 = vshrl.u32 %v1132, 7
    %v1134 = vsub.s32 0, %v1133
    %v1135 = vrot.slane %v1130, %v1134
    %v1136 = vadd.bf16 %v1127, %v1135
    %v1137 = vmax.bf16 %v1136, 0
    %v1138 = vld [vmem:[#allocation11] sm:$0xf]
    %v1139 = vld [vmem:[#allocation11 + $0x4] sm:$0xf]
    %v1140 = vld [vmem:[#allocation11 + $0x8] sm:$0xf]
    %v1141 = vld [vmem:[#allocation11 + $0xc] sm:$0xf]
    %v1142 = vld [vmem:[#allocation11 + $0x10] sm:$0xf]
    %v1143 = vld [vmem:[#allocation11 + $0x14] sm:$0xf]
    %v1144 = vld [vmem:[#allocation11 + $0x18] sm:$0xf]
    %v1145 = vld [vmem:[#allocation11 + $0x1c] sm:$0xf]
    %v1146 = vld [vmem:[#allocation11 + $0x20] sm:$0xf]
    %v1147 = vld [vmem:[#allocation11 + $0x24] sm:$0xf]
    %v1148 = vld [vmem:[#allocation11 + $0x28] sm:$0xf]
    %v1149 = vld [vmem:[#allocation11 + $0x2c] sm:$0xf]
    %v1150 = vld [vmem:[#allocation11 + $0x30] sm:$0xf]
    %v1151 = vld [vmem:[#allocation11 + $0x34] sm:$0xf]
    %v1152 = vld [vmem:[#allocation11 + $0x38] sm:$0xf]
    %v1153 = vld [vmem:[#allocation11 + $0x3c] sm:$0xf]
    %v1154 = vld [vmem:[%s10] sm:$0x1]
    %v1156 = vlaneseq
    %v1157 = vshrl.u32 %v1156, 7
    %v1158 = vsub.s32 0, %v1157
    %v1159 = vrot.slane %v1154, %v1158
    %v1177 = vunpack.c.l.b16 %v1138
    %v1178 = vunpack.c.l.b16 %v1139
    %v1179 = vunpack.c.l.b16 %v1140
    %v1180 = vunpack.c.l.b16 %v1141
    %v1181 = vunpack.c.l.b16 %v1142
    %v1182 = vunpack.c.l.b16 %v1143
    %v1183 = vunpack.c.l.b16 %v1144
    %v1184 = vunpack.c.l.b16 %v1145
    %v1185 = vunpack.c.l.b16 %v1146
    %v1186 = vunpack.c.l.b16 %v1147
    %v1187 = vunpack.c.l.b16 %v1148
    %v1188 = vunpack.c.l.b16 %v1149
    %v1189 = vunpack.c.l.b16 %v1150
    %v1190 = vunpack.c.l.b16 %v1151
    %v1191 = vunpack.c.l.b16 %v1152
    %v1192 = vunpack.c.l.b16 %v1153
    %v1193 = vpack.c.b16 %v1178, %v1177
    %v1194 = vpack.c.b16 %v1180, %v1179
    %v1195 = vpack.c.b16 %v1182, %v1181
    %v1196 = vpack.c.b16 %v1184, %v1183
    %v1197 = vpack.c.b16 %v1186, %v1185
    %v1198 = vpack.c.b16 %v1188, %v1187
    %v1199 = vpack.c.b16 %v1190, %v1189
    %v1200 = vpack.c.b16 %v1192, %v1191
    %1209 = vmatprep.subr.bf16.mxu0 0
    %1210 = vmatpush1.bf16.msra.mxu0 %v1193
    %1211 = vmatprep.subr.bf16.mxu0 0
    %1212 = vmatpush1.bf16.msra.mxu0 %v1194
    %1213 = vmatprep.subr.bf16.mxu0 0
    %1214 = vmatpush1.bf16.msra.mxu0 %v1195
    %1215 = vmatprep.subr.bf16.mxu0 0
    %1216 = vmatpush1.bf16.msra.mxu0 %v1196
    %1217 = vmatprep.subr.bf16.mxu0 0
    %1218 = vmatpush1.bf16.msra.mxu0 %v1197
    %1219 = vmatprep.subr.bf16.mxu0 0
    %1220 = vmatpush1.bf16.msra.mxu0 %v1198
    %1221 = vmatprep.subr.bf16.mxu0 0
    %1222 = vmatpush1.bf16.msra.mxu0 %v1199
    %1223 = vmatprep.subr.bf16.mxu0 0
    %1224 = vmatpush1.bf16.msra.mxu0 %v1200
    %1225 = vmatprep.subr.bf16.mxu0 0
    %1226 = vmatpush1.bf16.msra.mxu0 0
    %1227 = vmatprep.subr.bf16.mxu0 0
    %1228 = vmatpush1.bf16.msra.mxu0 0
    %1229 = vmatprep.subr.bf16.mxu0 0
    %1230 = vmatpush1.bf16.msra.mxu0 0
    %1231 = vmatprep.subr.bf16.mxu0 0
    %1232 = vmatpush1.bf16.msra.mxu0 0
    %1233 = vmatprep.subr.bf16.mxu0 0
    %1234 = vmatpush1.bf16.msra.mxu0 0
    %1235 = vmatprep.subr.bf16.mxu0 0
    %1236 = vmatpush1.bf16.msra.mxu0 0
    %1237 = vmatprep.subr.bf16.mxu0 0
    %1238 = vmatpush1.bf16.msra.mxu0 0
    %1239 = vmatprep.subr.bf16.mxu0 0
    %1240 = vmatpush1.bf16.msra.mxu0 0
    %1241 = vmatprep.mubr.bf16.mxu0 0
    %1242 = vmatmul.mubr.bf16.gmra.mrb[0].mxu0 %v1137
    %v1243 = vpop.f32.mrb[0].mxu0
    %v1244 = vadd.f32 %v1159, %v1243
    %v1245 = vpop.f32.mrb[0].mxu0
    %v1246 = vpop.f32.mrb[0].mxu0
    %v1247 = vpop.f32.mrb[0].mxu0
    %1248 = vdwg.mxu0
    %1249 = vst [vmem:[#allocation13] sm:$0xff] %v1244
    // Predicated region
    $region70: #{tpu_custom_call.1} parent=1 // pred_check
      _
    $region71: #{tpu_custom_call.1} parent=1 // pred_check_branch
      %1251 = sbr.rel (0) target = $region73
    $region72: #{tpu_custom_call.1} parent=1 // pred_region
      %s1253 = ssub.s32 128, 128
      %1254 = vsyncadd [#allocation4], %s1253
      %s1256 = sshll.u32 [#allocation13], 4
      %s1257 = int_to_ptr.vmem [resolvable:$true] %s1256
      %1259 = dma.vmem_to_hbm [thread:$0]  %s1257, 128, %s11, [#allocation4]
    $region73: #{tpu_custom_call.1} parent=1 // pred_fallthru
      _
    // Predicated region
    $region74: #{tpu_custom_call.1} parent=1 // pred_check
      _
    $region75: #{tpu_custom_call.1} parent=1 // pred_check_branch
      %1261 = sbr.rel (0) target = $region77
    $region76: #{tpu_custom_call.1} parent=1 // pred_region
      %1262 = dma.done [#allocation4], 128
    $region77: #{tpu_custom_call.1} parent=1 // pred_fallthru
      _
    %1263 = vsyncpa [#allocation3], 1
    %1264 = vsyncpa [#allocation6], 1
    %1265 = vsyncpa [#allocation9], 1
    %1266 = vsyncpa [#allocation12], 1
    %1267 = vsyncpa [#allocation4], 1

</llo_original>
